<compile_context>
chip_gen: v7x
topology: tpu7x:2x2x1
jax: 0.10.0
libtpu: 0.0.40
codegen_flags: <defaults>
</compile_context>

<pallas_src>
import jax
import jax.numpy as jnp
from jax.experimental import pallas as pl
from jax.experimental.pallas import tpu as pltpu

_LANES = 128
_MAX_TILE_ROWS = 2048   # (2048,128) f32 = 1 MiB/input/buffer -> ~6 MiB VMEM total
_NUM_PARTS = 2          # outer "parallel" axis (megacore on v7x)


def _l1_partial_kernel(a_ref, b_ref, o_ref):
    """Accumulate |a - b| elementwise into the resident output block.

    grid = (parts, tiles_per_part). Axis 1 is the reduction ("arbitrary") axis,
    so the output block (indexed only by `p`) stays resident in VMEM across it.
    Per-iteration work is pure VPU adds; no cross-lane reduction in the loop.
    """
    t = pl.program_id(1)

    @pl.when(t == 0)
    def _():
        o_ref[...] = jnp.zeros_like(o_ref)

    a = a_ref[...].astype(jnp.float32)
    b = b_ref[...].astype(jnp.float32)
    o_ref[...] += jnp.abs(a - b)[None, :, :]


def l1_loss_pallas(pred, target):
    """Mean absolute error, computed with a Pallas TPU kernel."""
    assert pred.shape == target.shape, "broadcasting not supported (matches F.l1_loss on equal shapes)"
    n = pred.size
    if n == 0:
        return jnp.float32(0.0)

    # Keep the streaming dtype narrow: bf16 stays bf16 through the DMA (half the
    # HBM bytes) and is widened to f32 inside the kernel. Other dtypes -> f32.
    dt = jnp.promote_types(pred.dtype, target.dtype)
    if dt == jnp.bfloat16:
        sublane = 16
    elif dt == jnp.float32:
        sublane = 8
    else:
        dt = jnp.dtype(jnp.float32)
        sublane = 8

    a = jnp.ravel(pred).astype(dt)    # free reshape; astype is a no-op if dtype matches
    b = jnp.ravel(target).astype(dt)

    rows_full = n // _LANES
    lane_rem = n - rows_full * _LANES

    # Tile rows: as large as possible (amortize per-step overhead), multiple of the
    # sublane granularity, capped so inputs + output block fit scoped VMEM on all chips.
    tile_rows = min(_MAX_TILE_ROWS, (rows_full // sublane) * sublane)

    if tile_rows == 0:
        # Tensor too small to tile: trivial jnp fallback.
        d = jnp.abs(a.astype(jnp.float32) - b.astype(jnp.float32))
        return jnp.sum(d) / jnp.float32(n)

    num_tiles = rows_full // tile_rows
    parts = _NUM_PARTS if num_tiles >= _NUM_PARTS else 1
    tiles_per_part = num_tiles // parts
    rows_main = parts * tiles_per_part * tile_rows
    main_elems = rows_main * _LANES

    if lane_rem == 0:
        # Contiguous flat -> (rows, 128) is a free reshape: no extra HBM pass.
        a2 = a.reshape(rows_full, _LANES)
        b2 = b.reshape(rows_full, _LANES)
    else:
        # n not divisible by 128: one slice to get a lane-dense 2D main body.
        a2 = a[: rows_full * _LANES].reshape(rows_full, _LANES)
        b2 = b[: rows_full * _LANES].reshape(rows_full, _LANES)

    in_map = lambda p, t: (p * tiles_per_part + t, 0)

    partials = pl.pallas_call(
        _l1_partial_kernel,
        out_shape=jax.ShapeDtypeStruct((parts, tile_rows, _LANES), jnp.float32),
        grid_spec=pltpu.PrefetchScalarGridSpec(
            num_scalar_prefetch=0,
            grid=(parts, tiles_per_part),
            in_specs=[
                pl.BlockSpec((tile_rows, _LANES), in_map),
                pl.BlockSpec((tile_rows, _LANES), in_map),
            ],
            out_specs=pl.BlockSpec((1, tile_rows, _LANES), lambda p, t: (p, 0, 0)),
        ),
        compiler_params=pltpu.CompilerParams(
            dimension_semantics=("parallel", "arbitrary"),
        ),
    )(a2, b2)

    total = jnp.sum(partials)

    # Remainder not covered by full tiles (leftover rows + sub-128 tail): tiny jnp reduce.
    if main_elems < n:
        ta = a[main_elems:].astype(jnp.float32)
        tb = b[main_elems:].astype(jnp.float32)
        total = total + jnp.sum(jnp.abs(ta - tb))

    return total / jnp.float32(n)


class L1:
    """JAX/Pallas port of models/losses.py::L1."""

    def __init__(self, branch="diffuse", target="diffuse"):
        self.branch = branch
        self.target = target

    def __call__(self, _output, _input):
        if self.branch not in _output or self.target not in _input:
            # PyTorch returns torch.tensor(0) on the target's device.
            return jnp.zeros((), dtype=jnp.int32)
        return l1_loss_pallas(_output[self.branch], _input[self.target])


if __name__ == "__main__":
    key = jax.random.PRNGKey(0)
    k1, k2, k3, k4 = jax.random.split(key, 4)

    loss_mod = L1(branch="diffuse", target="diffuse")

    # 1) Small NCHW example consistent with an image-branch loss.
    pred = jax.random.normal(k1, (2, 4, 16, 16), dtype=jnp.float32)
    targ = jax.random.normal(k2, (2, 4, 16, 16), dtype=jnp.float32)
    out = loss_mod({"diffuse": pred}, {"diffuse": targ})
    out = jax.block_until_ready(out)
    ref = jnp.mean(jnp.abs(pred - targ))
    assert jnp.allclose(out, ref, rtol=1e-6, atol=1e-6), (out, ref)

    # 2) Non-128-divisible element count (exercises the jnp tail path).
    pred2 = jax.random.normal(k3, (2, 3, 25, 77), dtype=jnp.float32)
    targ2 = jax.random.normal(k4, (2, 3, 25, 77), dtype=jnp.float32)
    out2 = jax.block_until_ready(loss_mod({"diffuse": pred2}, {"diffuse": targ2}))
    ref2 = jnp.mean(jnp.abs(pred2 - targ2))
    assert jnp.allclose(out2, ref2, rtol=1e-5, atol=1e-6), (out2, ref2)

    # 3) bf16 inputs stream as bf16 and are widened in-kernel.
    pred3 = pred.astype(jnp.bfloat16)
    targ3 = targ.astype(jnp.bfloat16)
    out3 = jax.block_until_ready(loss_mod({"diffuse": pred3}, {"diffuse": targ3}))
    ref3 = jnp.mean(jnp.abs(pred3.astype(jnp.float32) - targ3.astype(jnp.float32)))
    assert jnp.allclose(out3, ref3, rtol=1e-5, atol=1e-6), (out3, ref3)

    # Missing-key path returns 0 (mirrors the torch module's early return).
    zero = loss_mod({"specular": pred}, {"diffuse": targ})
    assert int(zero) == 0

    print("KERNEL_OK")
</pallas_src>

<mosaic_0001>
module attributes {stable_mosaic.version = 11 : i64} {
  func.func @_l1_partial_kernel(%arg0: i32, %arg1: i32, %arg2: memref<16x128xf32, #tpu.memory_space<vmem>>, %arg3: memref<16x128xf32, #tpu.memory_space<vmem>>, %arg4: memref<1x16x128xf32, #tpu.memory_space<vmem>>) attributes {dimension_semantics = [#tpu.dimension_semantics<parallel>, #tpu.dimension_semantics<arbitrary>], iteration_bounds = array<i64: 1, 1>, scalar_prefetch = 0 : i64, scratch_operands = 0 : i64, tpu.core_type = #tpu.core_type<tc>, window_params = [{transform_indices = @transform_0, window_bounds = array<i64: 16, 128>}, {transform_indices = @transform_1, window_bounds = array<i64: 16, 128>}, {transform_indices = @transform_2, window_bounds = array<i64: 1, 16, 128>}]} {
    %c0_i32 = arith.constant 0 : i32
    %0 = arith.cmpi eq, %arg1, %c0_i32 : i32
    %1 = arith.extui %0 : i1 to i32
    %c0_i32_0 = arith.constant 0 : i32
    %2 = arith.cmpi ne, %1, %c0_i32_0 : i32
    scf.if %2 {
      %cst = arith.constant 0.000000e+00 : f32
      %11 = vector.broadcast %cst : f32 to vector<1x16x128xf32>
      %c0_10 = arith.constant 0 : index
      %c0_11 = arith.constant 0 : index
      %c0_12 = arith.constant 0 : index
      %12 = vector.load %arg4[%c0_10, %c0_11, %c0_12] : memref<1x16x128xf32, #tpu.memory_space<vmem>>, vector<1x16x128xf32>
      tpu.vector_store %arg4[%c0_10, %c0_11, %c0_12], %11 {strides = array<i32>} : memref<1x16x128xf32, #tpu.memory_space<vmem>>, vector<1x16x128xf32>,
    } else {
    }
    %c0 = arith.constant 0 : index
    %c0_1 = arith.constant 0 : index
    %3 = vector.load %arg2[%c0, %c0_1] : memref<16x128xf32, #tpu.memory_space<vmem>>, vector<16x128xf32>
    %c0_2 = arith.constant 0 : index
    %c0_3 = arith.constant 0 : index
    %4 = vector.load %arg3[%c0_2, %c0_3] : memref<16x128xf32, #tpu.memory_space<vmem>>, vector<16x128xf32>
    %c0_4 = arith.constant 0 : index
    %c0_5 = arith.constant 0 : index
    %c0_6 = arith.constant 0 : index
    %5 = vector.load %arg4[%c0_4, %c0_5, %c0_6] : memref<1x16x128xf32, #tpu.memory_space<vmem>>, vector<1x16x128xf32>
    %6 = arith.subf %3, %4 : vector<16x128xf32>
    %7 = math.absf %6 : vector<16x128xf32>
    %8 = vector.shape_cast %7 : vector<16x128xf32> to vector<1x16x128xf32>
    %9 = arith.addf %5, %8 : vector<1x16x128xf32>
    %c0_7 = arith.constant 0 : index
    %c0_8 = arith.constant 0 : index
    %c0_9 = arith.constant 0 : index
    %10 = vector.load %arg4[%c0_7, %c0_8, %c0_9] : memref<1x16x128xf32, #tpu.memory_space<vmem>>, vector<1x16x128xf32>
    tpu.vector_store %arg4[%c0_7, %c0_8, %c0_9], %9 {strides = array<i32>} : memref<1x16x128xf32, #tpu.memory_space<vmem>>, vector<1x16x128xf32>,
    return
  }
  func.func @transform_0(%arg0: i32, %arg1: i32) -> (i32, i32) {
    %c1_i32 = arith.constant 1 : i32
    %0 = arith.muli %arg0, %c1_i32 : i32
    %1 = arith.addi %0, %arg1 : i32
    %c0_i32 = arith.constant 0 : i32
    %c0_i32_0 = arith.constant 0 : i32
    return %1, %c0_i32 : i32, i32
  }
  func.func @transform_1(%arg0: i32, %arg1: i32) -> (i32, i32) {
    %c1_i32 = arith.constant 1 : i32
    %0 = arith.muli %arg0, %c1_i32 : i32
    %1 = arith.addi %0, %arg1 : i32
    %c0_i32 = arith.constant 0 : i32
    %c0_i32_0 = arith.constant 0 : i32
    return %1, %c0_i32 : i32, i32
  }
  func.func @transform_2(%arg0: i32, %arg1: i32) -> (i32, i32, i32) {
    %c0_i32 = arith.constant 0 : i32
    %c0_i32_0 = arith.constant 0 : i32
    %c0_i32_1 = arith.constant 0 : i32
    return %arg0, %c0_i32, %c0_i32_0 : i32, i32, i32
  }
}

</mosaic_0001>

<llo_original>
// kernel: tpu_custom_call.1
$region0: #{tpu_custom_call.1}
  #allocation0 [shape = 'u32[]', space=smem, size = 0x4, offset = 0x4, fixed_abs, tag = 'smem constant byte address 0x4 - core index']
  #allocation1 [shape = 'u32[144,128]{1,0:T(1,128)}', space=vmem, size = 0x12000, scoped, tag = 'internal scratch']
  %s0 = inlined_call_operand.hbm [shape: f32[16,128], index: 0, kind: input, shape index: {}]
  %s1 = inlined_call_operand.hbm [shape: f32[16,128], index: 1, kind: input, shape index: {}]
  %s2 = inlined_call_operand.hbm [shape: f32[1,16,128], index: 2, kind: output, shape index: {}]
  %s3 = sld [smem:[#allocation0]]
  $region30: #{tpu_custom_call.1} parent=0
    _
  %s5 = ssub.s32 1, %s3
  %s6 = scalar_select 0, %s5, %s3
  $region1: #{tpu_custom_call.1} parent=0
    #allocation2 [shape = 'u8[8192]{0}', space=vmem, size = 0x2000, scoped, tag = 'input window, operand 0, single buffered']
    #allocation3 [shape = 's32[1]{0}', space=sflag, size = 0x4, scoped, tag = 'scoped memory for tpu_custom_call.1']
    #allocation4 [shape = 's32[1]{0}', space=sflag, size = 0x4, scoped, tag = 'scoped memory for tpu_custom_call.1']
    #allocation5 [shape = 'u8[8192]{0}', space=vmem, size = 0x2000, scoped, tag = 'input window, operand 1, single buffered']
    #allocation6 [shape = 's32[1]{0}', space=sflag, size = 0x4, scoped, tag = 'scoped memory for tpu_custom_call.1']
    #allocation7 [shape = 'u8[8192]{0}', space=vmem, size = 0x2000, scoped, tag = 'output window, operand 0, single buffered']
    %7 = vsyncpa [#allocation3], 0
    %8 = vsyncpa [#allocation6], 0
    %9 = vsyncpa [#allocation4], 0
    // Predicated region
    $region2: #{tpu_custom_call.1} parent=1 // pred_check
      _
    $region3: #{tpu_custom_call.1} parent=1 // pred_check_branch
      %11 = sbr.rel (0) target = $region5
    $region4: #{tpu_custom_call.1} parent=1 // pred_region
      %s12 = sadd.s32 0, 0
      %s13 = smul.u32 2, %s12
      %s15 = ssub.s32 256, 256
      %16 = vsyncadd [#allocation3], %s15
      %s17 = smul.addr %s13, 128
      %s18 = scalar_lea.hbm %s0, %s17
      %s19 = sshll.u32 [#allocation2], 4
      %s20 = int_to_ptr.vmem [resolvable:$true] %s19
      %25 = dma.hbm_to_vmem [thread:$0]  %s18, 256, %s20, [#allocation3], 128, 128, 8
    $region5: #{tpu_custom_call.1} parent=1 // pred_fallthru
      _
    // Predicated region
    $region6: #{tpu_custom_call.1} parent=1 // pred_check
      _
    $region7: #{tpu_custom_call.1} parent=1 // pred_check_branch
      %27 = sbr.rel (0) target = $region9
    $region8: #{tpu_custom_call.1} parent=1 // pred_region
      %s28 = sadd.s32 0, 0
      %s29 = smul.u32 2, %s28
      %s31 = ssub.s32 256, 256
      %32 = vsyncadd [#allocation6], %s31
      %s33 = smul.addr %s29, 128
      %s34 = scalar_lea.hbm %s1, %s33
      %s35 = sshll.u32 [#allocation5], 4
      %s36 = int_to_ptr.vmem [resolvable:$true] %s35
      %41 = dma.hbm_to_vmem [thread:$0]  %s34, 256, %s36, [#allocation6], 128, 128, 8
    $region9: #{tpu_custom_call.1} parent=1 // pred_fallthru
      _
    // Predicated region
    $region10: #{tpu_custom_call.1} parent=1 // pred_check
      _
    $region11: #{tpu_custom_call.1} parent=1 // pred_check_branch
      %43 = sbr.rel (0) target = $region13
    $region12: #{tpu_custom_call.1} parent=1 // pred_region
      %44 = dma.done [#allocation3], 256
    $region13: #{tpu_custom_call.1} parent=1 // pred_fallthru
      _
    // Predicated region
    $region14: #{tpu_custom_call.1} parent=1 // pred_check
      _
    $region15: #{tpu_custom_call.1} parent=1 // pred_check_branch
      %46 = sbr.rel (0) target = $region17
    $region16: #{tpu_custom_call.1} parent=1 // pred_region
      %47 = dma.done [#allocation6], 256
    $region17: #{tpu_custom_call.1} parent=1 // pred_fallthru
      _
    %s48 = sadd.s32 0, 0
    %s49 = smul.u32 2, %s48
    %s50 = sadd.s32 0, 0
    %s51 = smul.u32 2, %s50
    %p52 = scmp.eq.s32.totalorder 0, 0
    // Predicated region
    $region18: #{tpu_custom_call.1} parent=1 // pred_check
      %p53 = pneg %p52
    $region19: #{tpu_custom_call.1} parent=1 // pred_check_branch
      %55 = sbr.rel (%p53) target = $region21
    $region20: #{tpu_custom_call.1} parent=1 // pred_region
      %56 = vst [vmem:[#allocation7] sm:$0xff] 0.0
      %57 = vst [vmem:[#allocation7 + $0x8] sm:$0xff] 0.0
    $region21: #{tpu_custom_call.1} parent=1 // pred_fallthru
      _
    %v58 = vld [vmem:[#allocation2] sm:$0xff]
    %v59 = vld [vmem:[#allocation2 + $0x8] sm:$0xff]
    %v60 = vld [vmem:[#allocation5] sm:$0xff]
    %v61 = vld [vmem:[#allocation5 + $0x8] sm:$0xff]
    %v62 = vld [vmem:[#allocation7] sm:$0xff]
    %v63 = vld [vmem:[#allocation7 + $0x8] sm:$0xff]
    %v64 = vsub.f32 %v58, %v60
    %v65 = vsub.f32 %v59, %v61
    %v66 = vand.u32 2147483647, %v64
    %v67 = vand.u32 2147483647, %v65
    %v68 = vadd.f32 %v62, %v66
    %v69 = vadd.f32 %v63, %v67
    %70 = vst [vmem:[#allocation7] sm:$0xff] %v68
    %71 = vst [vmem:[#allocation7 + $0x8] sm:$0xff] %v69
    // Predicated region
    $region22: #{tpu_custom_call.1} parent=1 // pred_check
      _
    $region23: #{tpu_custom_call.1} parent=1 // pred_check_branch
      %73 = sbr.rel (0) target = $region25
    $region24: #{tpu_custom_call.1} parent=1 // pred_region
      %s75 = ssub.s32 256, 256
      %76 = vsyncadd [#allocation4], %s75
      %s77 = sshll.u32 [#allocation7], 4
      %s78 = int_to_ptr.vmem [resolvable:$true] %s77
      %83 = dma.vmem_to_hbm [thread:$0]  %s78, 256, %s2, [#allocation4], 128, 128, 8
    $region25: #{tpu_custom_call.1} parent=1 // pred_fallthru
      _
    // Predicated region
    $region26: #{tpu_custom_call.1} parent=1 // pred_check
      _
    $region27: #{tpu_custom_call.1} parent=1 // pred_check_branch
      %85 = sbr.rel (0) target = $region29
    $region28: #{tpu_custom_call.1} parent=1 // pred_region
      %86 = dma.done [#allocation4], 256
    $region29: #{tpu_custom_call.1} parent=1 // pred_fallthru
      _
    %87 = vsyncpa [#allocation3], 1
    %88 = vsyncpa [#allocation6], 1
    %89 = vsyncpa [#allocation4], 1

</llo_original>
